<compile_context>
chip_gen: v7x
topology: tpu7x:2x2x1
jax: 0.10.0
libtpu: 0.0.40
codegen_flags: <defaults>
</compile_context>

<pallas_src>
from dataclasses import dataclass
from functools import lru_cache, partial
from typing import Callable, Optional

import jax
import jax.numpy as jnp
from jax.experimental import pallas as pl
from jax.experimental.pallas import tpu as pltpu


# ----------------------------- dataclasses (mirroring the PyTorch module) ---

@dataclass
class EncoderInput:
    """Data class for Encoder Input"""
    data_norm_type: str
    image: jnp.ndarray  # NCHW float32


@dataclass
class EncoderOutput:
    """Data class for Encoder Output"""
    features: jnp.ndarray  # (B, num_patches, embed_dim)


# ----------------------------- helpers ---------------------------------------

_MIB = 1024 * 1024


def _round_up(x: int, m: int) -> int:
    return ((x + m - 1) // m) * m


@lru_cache(maxsize=1)
def _vmem_profile():
    """(max_tile_m, vmem_budget_bytes, vmem_limit_bytes) per TPU generation.

    v5e/v6e have 128 MiB of VMEM per core (bigger tiles, fewer grid steps pay
    off); v7x only 64 MiB (leave headroom for Mosaic internal scratch).  Falls
    back to the conservative v7x-safe numbers if the query is unavailable."""
    try:
        info = pltpu.get_tpu_info()
        vmem = int(getattr(info, "vmem_capacity_bytes", 64 * _MIB))
    except Exception:
        vmem = 64 * _MIB
    if vmem >= 100 * _MIB:                      # v5e / v6e (128 MiB)
        return 2048, 88 * _MIB, 100 * _MIB
    return 512, 40 * _MIB, 48 * _MIB            # v7x (64 MiB) or unknown


def _pick_tile_m(n_rows: int, K: int, D: int, out_bytes: int, *,
                 max_tile_m: int, vmem_budget_bytes: int) -> int:
    """Largest row tile whose VMEM footprint fits the budget.

    Accounting: weight (bf16) + bias (f32) are single-buffered (Buffered(1),
    constant index_map); the bf16 input patch tile and the output tile are
    double-buffered by the default pipeline."""
    fixed = K * D * 2 + D * 4                   # resident weight + bias
    tile = max_tile_m
    while tile > 16:
        stream = 2 * tile * K * 2 + 2 * tile * D * out_bytes
        if fixed + stream <= vmem_budget_bytes:
            break
        tile //= 2
    tile = max(tile, 16)                        # bf16 sublane packing
    # Keep >= 2 grid steps whenever possible so the "parallel" row axis can
    # shard across v7x's 2 TensorCores (no effect on 1-TC v5e/v6e).
    tile = min(tile, max(16, _round_up(pl.cdiv(n_rows, 2), 16)))
    if tile >= n_rows:
        return n_rows                           # single full-extent block
    return tile                                 # multiple of 16; last tile may be ragged


# ----------------------------- Pallas kernel --------------------------------

def _patch_embed_kernel(p_ref, w_ref, b_ref, o_ref):
    """One row-tile of tokens: o = p @ w + b (bf16 MXU matmul, f32 accumulate)."""
    acc = jnp.dot(p_ref[...], w_ref[...], preferred_element_type=jnp.float32)
    # (1, D) bias is added via the implicit broadcast on purpose: an explicit
    # broadcast_to would be re-emitted every grid step (no CSE) and only adds
    # VALU/vreg pressure.
    o_ref[...] = (acc + b_ref[...]).astype(o_ref.dtype)


def patch_embed_pallas(patches: jnp.ndarray,
                       weight: jnp.ndarray,
                       bias: jnp.ndarray,
                       *,
                       out_dtype=jnp.bfloat16) -> jnp.ndarray:
    """patches: (N, K), weight: (K, D), bias: (D,) -> (N, D) in `out_dtype`."""
    N, K = patches.shape
    K2, D = weight.shape
    assert K == K2, f"K mismatch: patches {K} vs weight {K2}"

    # bf16 operands: half the HBM read traffic, bf16-native MXU on all chips.
    patches = patches.astype(jnp.bfloat16)
    weight = weight.astype(jnp.bfloat16)
    bias2d = bias.astype(jnp.float32).reshape(1, D)

    max_tile_m, vmem_budget, vmem_limit = _vmem_profile()
    out_bytes = jnp.dtype(out_dtype).itemsize
    tile_m = _pick_tile_m(N, K, D, out_bytes,
                          max_tile_m=max_tile_m, vmem_budget_bytes=vmem_budget)
    grid_m = pl.cdiv(N, tile_m)

    cost = pl.CostEstimate(
        flops=2 * N * K * D,
        transcendentals=0,
        bytes_accessed=N * K * 2 + K * D * 2 + N * D * out_bytes + D * 4,
    )

    out = pl.pallas_call(
        _patch_embed_kernel,
        out_shape=jax.ShapeDtypeStruct((N, D), out_dtype),
        grid_spec=pltpu.PrefetchScalarGridSpec(
            num_scalar_prefetch=0,
            grid=(grid_m,),
            in_specs=[
                # Token-row tile (double-buffered by the default pipeline).
                pl.BlockSpec((tile_m, K), lambda i: (i, 0)),
                # Weight / bias: constant index_map -> fetched once; a single
                # pipeline buffer frees K*D*2 + D*4 bytes of VMEM.
                pl.BlockSpec((K, D), lambda i: (0, 0),
                             pipeline_mode=pl.Buffered(1)),
                pl.BlockSpec((1, D), lambda i: (0, 0),
                             pipeline_mode=pl.Buffered(1)),
            ],
            # Lane-dense output: D un-tiled (production D should be a multiple
            # of 128 to avoid masked partial stores; toy D=32 is legal because
            # the block equals the full array).
            out_specs=pl.BlockSpec((tile_m, D), lambda i: (i, 0)),
        ),
        compiler_params=pltpu.CompilerParams(
            # Independent row-tile axis -> shards across v7x's 2 TensorCores.
            dimension_semantics=("parallel",),
            vmem_limit_bytes=vmem_limit,
        ),
        cost_estimate=cost,
    )(patches, weight, bias2d)

    return out


# ----------------------------- jitted forward glue ---------------------------

@partial(jax.jit, static_argnames=("patch_size", "k_pad", "out_dtype"))
def _vit_patch_embed(image: jnp.ndarray, weight: jnp.ndarray, bias: jnp.ndarray,
                     *, patch_size: int, k_pad: int, out_dtype) -> jnp.ndarray:
    """NCHW image -> (B, num_patches, D) tokens. Layout pass + Pallas matmul."""
    B, C, H, W = image.shape
    P = patch_size
    Hp, Wp = H // P, W // P
    D = weight.shape[1]
    K = P * P * C

    # Patchify: NCHW -> (B*Hp*Wp, K) with per-patch feature order (py, px, c).
    # Cast to bf16 first so the transpose writes the intermediate at half
    # width; the 128-lane K padding (when needed) is applied on the same
    # producer so it fuses into that single layout write.  No row padding is
    # needed at all: ragged trailing row tiles are masked by Pallas.
    # TODO(synk): fusing this layout pass into the Pallas kernel (reading the
    # f32 NCHW image directly) would remove the remaining (N, K) bf16 HBM round
    # trip (~40-50% of input traffic); the W -> (Wp, P) lane split it requires
    # is a Mosaic in-VMEM relayout that is not reliably lowerable/performant
    # for arbitrary patch sizes, so the rearrangement stays in XLA for now.
    x = image.astype(jnp.bfloat16).reshape(B, C, Hp, P, Wp, P)
    x = jnp.transpose(x, (0, 2, 4, 3, 5, 1))        # (B, Hp, Wp, P, P, C)
    patches = x.reshape(B * Hp * Wp, K)
    if k_pad != K:
        patches = jnp.pad(patches, ((0, 0), (0, k_pad - K)))

    tokens = patch_embed_pallas(patches, weight, bias, out_dtype=out_dtype)
    return tokens.reshape(B, Hp * Wp, D)


# ----------------------------- Encoder classes -------------------------------

class UniCeptionEncoderBase:
    """Encoder Base Class for UniCeption (JAX port)."""

    def __init__(self, name: str, data_norm_type: str, size: Optional[str] = None):
        self.name = name
        self.size = size
        self.data_norm_type = data_norm_type

    def _check_data_normalization_type(self, data_norm_type: str):
        assert data_norm_type == self.data_norm_type, (
            f"Input normalization type {data_norm_type} does not match the "
            f"encoder's normalization type {self.data_norm_type}."
        )


class UniCeptionViTEncoderBase(UniCeptionEncoderBase):
    """Vision Transformer Encoder Base Class (JAX / Pallas port).

    The PyTorch base `forward` is abstract; here we provide the canonical ViT
    patch-embedding forward implied by `patch_size`, with the matmul hot path
    in a Pallas TPU kernel.
    """

    def __init__(self, patch_size: int, in_chans: int, embed_dim: int,
                 gradient_checkpointing: bool = False,
                 out_dtype=jnp.bfloat16, *args, **kwargs):
        super().__init__(*args, **kwargs)
        self.patch_size = patch_size
        self.gradient_checkpointing = gradient_checkpointing
        self.in_chans = in_chans
        self.embed_dim = embed_dim
        self.out_dtype = out_dtype

        # Deterministic synthetic parameters (shapes match a Conv2d patch
        # embedding with kernel_size = stride = patch_size, flattened to a
        # (P*P*C, D) matrix with per-patch feature order (py, px, c)).
        k = patch_size * patch_size * in_chans
        self.k = k
        # Lane-align the MXU contraction dim once at init (zero rows have no
        # numerical effect; no-op when K is already a multiple of 128).
        self.k_pad = _round_up(k, 128)

        wkey, bkey = jax.random.split(jax.random.PRNGKey(42))
        w = (jax.random.normal(wkey, (k, embed_dim), dtype=jnp.float32)
             * (1.0 / jnp.sqrt(jnp.float32(k))))
        if self.k_pad != k:
            w = jnp.pad(w, ((0, self.k_pad - k), (0, 0)))
        self.proj_weight = w
        self.proj_bias = jax.random.normal(bkey, (embed_dim,),
                                           dtype=jnp.float32) * 0.01

    def wrap_module_with_gradient_checkpointing(self, fn: Callable) -> Callable:
        """JAX analogue of torch.utils.checkpoint: rematerialization."""
        return jax.checkpoint(fn)

    def forward(self, encoder_input: EncoderInput) -> EncoderOutput:
        self._check_data_normalization_type(encoder_input.data_norm_type)

        x = encoder_input.image  # NCHW
        B, C, H, W = x.shape
        P = self.patch_size
        assert C == self.in_chans
        assert H % P == 0 and W % P == 0, "Image dims must be divisible by patch_size."

        tokens = _vit_patch_embed(x, self.proj_weight, self.proj_bias,
                                  patch_size=P, k_pad=self.k_pad,
                                  out_dtype=self.out_dtype)
        return EncoderOutput(features=tokens)

    __call__ = forward


# ----------------------------- main ------------------------------------------

if __name__ == "__main__":
    B, C, H, W = 2, 4, 16, 16
    patch_size = 8
    embed_dim = 32

    key = jax.random.PRNGKey(0)
    image = jax.random.normal(key, (B, C, H, W), dtype=jnp.float32)

    encoder = UniCeptionViTEncoderBase(
        patch_size=patch_size,
        in_chans=C,
        embed_dim=embed_dim,
        name="vit_base_synthetic",
        data_norm_type="dummy",
    )

    out = encoder(EncoderInput(data_norm_type="dummy", image=image))
    feats = jax.block_until_ready(out.features)

    # Cross-check against a plain-JAX reference with matching bf16 operand
    # rounding (the kernel does bf16 x bf16 -> f32 accumulate, bf16 output).
    Hp, Wp = H // patch_size, W // patch_size
    patches_ref = jnp.transpose(
        image.reshape(B, C, Hp, patch_size, Wp, patch_size),
        (0, 2, 4, 3, 5, 1),
    ).reshape(B * Hp * Wp, -1)
    p_bf = patches_ref.astype(jnp.bfloat16).astype(jnp.float32)
    w_bf = encoder.proj_weight[:encoder.k].astype(jnp.bfloat16).astype(jnp.float32)
    ref = (p_bf @ w_bf + encoder.proj_bias).reshape(B, Hp * Wp, embed_dim)

    assert feats.shape == (B, Hp * Wp, embed_dim)
    assert feats.dtype == jnp.dtype(encoder.out_dtype)
    feats_f32 = feats.astype(jnp.float32)
    max_err = float(jnp.max(jnp.abs(feats_f32 - ref)))
    assert jnp.allclose(feats_f32, ref, atol=6e-2, rtol=6e-2), max_err

    print("KERNEL_OK")
</pallas_src>

<mosaic_0001>
module attributes {stable_mosaic.version = 11 : i64} {
  func.func @_patch_embed_kernel(%arg0: i32, %arg1: memref<8x256xbf16, #tpu.memory_space<vmem>>, %arg2: memref<256x32xbf16, #tpu.memory_space<vmem>>, %arg3: memref<1x32xf32, #tpu.memory_space<vmem>>, %arg4: memref<8x32xbf16, #tpu.memory_space<vmem>>) attributes {dimension_semantics = [#tpu.dimension_semantics<parallel>], iteration_bounds = array<i64: 1>, scalar_prefetch = 0 : i64, scratch_operands = 0 : i64, tpu.core_type = #tpu.core_type<tc>, window_params = [{transform_indices = @transform_0, window_bounds = array<i64: 8, 256>}, {pipeline_mode = #tpu.pipeline_mode<synchronous>, transform_indices = @transform_1, window_bounds = array<i64: 256, 32>}, {pipeline_mode = #tpu.pipeline_mode<synchronous>, transform_indices = @transform_2, window_bounds = array<i64: 1, 32>}, {transform_indices = @transform_3, window_bounds = array<i64: 8, 32>}]} {
    %c0 = arith.constant 0 : index
    %c0_0 = arith.constant 0 : index
    %0 = vector.load %arg1[%c0, %c0_0] : memref<8x256xbf16, #tpu.memory_space<vmem>>, vector<8x256xbf16>
    %c0_1 = arith.constant 0 : index
    %c0_2 = arith.constant 0 : index
    %1 = vector.load %arg2[%c0_1, %c0_2] : memref<256x32xbf16, #tpu.memory_space<vmem>>, vector<256x32xbf16>
    %cst = arith.constant dense<0.000000e+00> : vector<8x32xf32>
    %2 = tpu.matmul %0, %1, %cst {dimension_numbers = #tpu.dot_dimension_numbers<[1], [0], [0], [1], [0, 0, 1, 1], [], []>} : vector<8x256xbf16>, vector<256x32xbf16>, vector<8x32xf32> -> vector<8x32xf32>
    %c0_3 = arith.constant 0 : index
    %c0_4 = arith.constant 0 : index
    %3 = vector.load %arg3[%c0_3, %c0_4] : memref<1x32xf32, #tpu.memory_space<vmem>>, vector<1x32xf32>
    %4 = vector.broadcast %3 : vector<1x32xf32> to vector<8x32xf32>
    %5 = arith.addf %2, %4 : vector<8x32xf32>
    %6 = arith.truncf %5 : vector<8x32xf32> to vector<8x32xbf16>
    %c0_5 = arith.constant 0 : index
    %c0_6 = arith.constant 0 : index
    %7 = vector.load %arg4[%c0_5, %c0_6] : memref<8x32xbf16, #tpu.memory_space<vmem>>, vector<8x32xbf16>
    tpu.vector_store %arg4[%c0_5, %c0_6], %6 {strides = array<i32>} : memref<8x32xbf16, #tpu.memory_space<vmem>>, vector<8x32xbf16>,
    return
  }
  func.func @transform_0(%arg0: i32) -> (i32, i32) {
    %c0_i32 = arith.constant 0 : i32
    %c0_i32_0 = arith.constant 0 : i32
    return %arg0, %c0_i32 : i32, i32
  }
  func.func @transform_1(%arg0: i32) -> (i32, i32) {
    %c0_i32 = arith.constant 0 : i32
    %c0_i32_0 = arith.constant 0 : i32
    %c0_i32_1 = arith.constant 0 : i32
    return %c0_i32, %c0_i32_0 : i32, i32
  }
  func.func @transform_2(%arg0: i32) -> (i32, i32) {
    %c0_i32 = arith.constant 0 : i32
    %c0_i32_0 = arith.constant 0 : i32
    %c0_i32_1 = arith.constant 0 : i32
    return %c0_i32, %c0_i32_0 : i32, i32
  }
  func.func @transform_3(%arg0: i32) -> (i32, i32) {
    %c0_i32 = arith.constant 0 : i32
    %c0_i32_0 = arith.constant 0 : i32
    return %arg0, %c0_i32 : i32, i32
  }
}

</mosaic_0001>

<llo_original>
// kernel: _vit_patch_embed.1
$region0: #{_vit_patch_embed.1}
  #allocation0 [shape = 'u32[]', space=smem, size = 0x4, offset = 0x4, fixed_abs, tag = 'smem constant byte address 0x4 - core index']
  #allocation1 [shape = 'u32[144,128]{1,0:T(1,128)}', space=vmem, size = 0x12000, scoped, tag = 'internal scratch']
  %s0 = inlined_call_operand.vmem [shape: bf16[8,256], index: 0, kind: input, shape index: {}]
  %s1 = inlined_call_operand.vmem [shape: bf16[256,32], index: 1, kind: input, shape index: {}]
  %s2 = inlined_call_operand.vmem [shape: f32[1,32], index: 2, kind: input, shape index: {}]
  %s3 = inlined_call_operand.hbm [shape: bf16[8,32], index: 3, kind: output, shape index: {}]
  %s4 = sld [smem:[#allocation0]]
  $region22: #{_vit_patch_embed.1} parent=0
    _
  %s6 = ssub.s32 1, %s4
  %s7 = scalar_select 0, %s6, %s4
  $region1: #{_vit_patch_embed.1} parent=0
    #allocation2 [shape = 'u8[2048]{0}', space=vmem, size = 0x800, scoped, tag = 'output window, operand 0, single buffered']
    #allocation3 [shape = 's32[1]{0}', space=sflag, size = 0x4, scoped, tag = 'scoped memory for _vit_patch_embed.1']
    %8 = vsyncpa [#allocation3], 0
    // Predicated region
    $region2: #{_vit_patch_embed.1} parent=1 // pred_check
      _
    $region3: #{_vit_patch_embed.1} parent=1 // pred_check_branch
      %10 = sbr.rel (0) target = $region5
    $region4: #{_vit_patch_embed.1} parent=1 // pred_region
      _
    $region5: #{_vit_patch_embed.1} parent=1 // pred_fallthru
      _
    // Predicated region
    $region6: #{_vit_patch_embed.1} parent=1 // pred_check
      _
    $region7: #{_vit_patch_embed.1} parent=1 // pred_check_branch
      %12 = sbr.rel (0) target = $region9
    $region8: #{_vit_patch_embed.1} parent=1 // pred_region
      _
    $region9: #{_vit_patch_embed.1} parent=1 // pred_fallthru
      _
    // Predicated region
    $region10: #{_vit_patch_embed.1} parent=1 // pred_check
      _
    $region11: #{_vit_patch_embed.1} parent=1 // pred_check_branch
      %14 = sbr.rel (0) target = $region13
    $region12: #{_vit_patch_embed.1} parent=1 // pred_region
      _
    $region13: #{_vit_patch_embed.1} parent=1 // pred_fallthru
      _
    %v16 = vld [vmem:[%s0] sm:$0xff]
    %v17 = vld [vmem:[%s1] sm:$0xf]
    %v18 = vld [vmem:[%s1 + $0x4] sm:$0xf]
    %v19 = vld [vmem:[%s1 + $0x8] sm:$0xf]
    %v20 = vld [vmem:[%s1 + $0xc] sm:$0xf]
    %v21 = vld [vmem:[%s1 + $0x10] sm:$0xf]
    %v22 = vld [vmem:[%s1 + $0x14] sm:$0xf]
    %v23 = vld [vmem:[%s1 + $0x18] sm:$0xf]
    %v24 = vld [vmem:[%s1 + $0x1c] sm:$0xf]
    %v25 = vld [vmem:[%s1 + $0x20] sm:$0xf]
    %v26 = vld [vmem:[%s1 + $0x24] sm:$0xf]
    %v27 = vld [vmem:[%s1 + $0x28] sm:$0xf]
    %v28 = vld [vmem:[%s1 + $0x2c] sm:$0xf]
    %v29 = vld [vmem:[%s1 + $0x30] sm:$0xf]
    %v30 = vld [vmem:[%s1 + $0x34] sm:$0xf]
    %v31 = vld [vmem:[%s1 + $0x38] sm:$0xf]
    %v32 = vld [vmem:[%s1 + $0x3c] sm:$0xf]
    %v33 = vld [vmem:[%s1 + $0x40] sm:$0xf]
    %v34 = vld [vmem:[%s1 + $0x44] sm:$0xf]
    %v35 = vld [vmem:[%s1 + $0x48] sm:$0xf]
    %v36 = vld [vmem:[%s1 + $0x4c] sm:$0xf]
    %v37 = vld [vmem:[%s1 + $0x50] sm:$0xf]
    %v38 = vld [vmem:[%s1 + $0x54] sm:$0xf]
    %v39 = vld [vmem:[%s1 + $0x58] sm:$0xf]
    %v40 = vld [vmem:[%s1 + $0x5c] sm:$0xf]
    %v41 = vld [vmem:[%s1 + $0x60] sm:$0xf]
    %v42 = vld [vmem:[%s1 + $0x64] sm:$0xf]
    %v43 = vld [vmem:[%s1 + $0x68] sm:$0xf]
    %v44 = vld [vmem:[%s1 + $0x6c] sm:$0xf]
    %v45 = vld [vmem:[%s1 + $0x70] sm:$0xf]
    %v46 = vld [vmem:[%s1 + $0x74] sm:$0xf]
    %v47 = vld [vmem:[%s1 + $0x78] sm:$0xf]
    %v48 = vld [vmem:[%s1 + $0x7c] sm:$0xf]
    %v49 = vld [vmem:[%s2] sm:$0x1]
    %v51 = vlaneseq
    %v52 = vshrl.u32 %v51, 7
    %v53 = vsub.s32 0, %v52
    %v54 = vrot.slane %v49, %v53
    %v57 = vunpack.c.l.b16 %v16
    %v58 = vunpack.c.h.b16 %v16
    %v59 = vpack.c.b16 %v57, %v57
    %v60 = vpack.c.b16 %v58, %v58
    %v95 = vunpack.c.l.b16 %v17
    %v96 = vunpack.c.l.b16 %v18
    %v97 = vunpack.c.l.b16 %v19
    %v98 = vunpack.c.l.b16 %v20
    %v99 = vunpack.c.l.b16 %v21
    %v100 = vunpack.c.l.b16 %v22
    %v101 = vunpack.c.l.b16 %v23
    %v102 = vunpack.c.l.b16 %v24
    %v103 = vunpack.c.l.b16 %v25
    %v104 = vunpack.c.l.b16 %v26
    %v105 = vunpack.c.l.b16 %v27
    %v106 = vunpack.c.l.b16 %v28
    %v107 = vunpack.c.l.b16 %v29
    %v108 = vunpack.c.l.b16 %v30
    %v109 = vunpack.c.l.b16 %v31
    %v110 = vunpack.c.l.b16 %v32
    %v111 = vunpack.c.l.b16 %v33
    %v112 = vunpack.c.l.b16 %v34
    %v113 = vunpack.c.l.b16 %v35
    %v114 = vunpack.c.l.b16 %v36
    %v115 = vunpack.c.l.b16 %v37
    %v116 = vunpack.c.l.b16 %v38
    %v117 = vunpack.c.l.b16 %v39
    %v118 = vunpack.c.l.b16 %v40
    %v119 = vunpack.c.l.b16 %v41
    %v120 = vunpack.c.l.b16 %v42
    %v121 = vunpack.c.l.b16 %v43
    %v122 = vunpack.c.l.b16 %v44
    %v123 = vunpack.c.l.b16 %v45
    %v124 = vunpack.c.l.b16 %v46
    %v125 = vunpack.c.l.b16 %v47
    %v126 = vunpack.c.l.b16 %v48
    %v127 = vpack.c.b16 %v96, %v95
    %v128 = vpack.c.b16 %v98, %v97
    %v129 = vpack.c.b16 %v100, %v99
    %v130 = vpack.c.b16 %v102, %v101
    %v131 = vpack.c.b16 %v104, %v103
    %v132 = vpack.c.b16 %v106, %v105
    %v133 = vpack.c.b16 %v108, %v107
    %v134 = vpack.c.b16 %v110, %v109
    %v135 = vpack.c.b16 %v112, %v111
    %v136 = vpack.c.b16 %v114, %v113
    %v137 = vpack.c.b16 %v116, %v115
    %v138 = vpack.c.b16 %v118, %v117
    %v139 = vpack.c.b16 %v120, %v119
    %v140 = vpack.c.b16 %v122, %v121
    %v141 = vpack.c.b16 %v124, %v123
    %v142 = vpack.c.b16 %v126, %v125
    %159 = vmatprep.subr.bf16.mxu0 0
    %160 = vmatpush1.bf16.msra.mxu0 %v127
    %161 = vmatprep.subr.bf16.mxu0 0
    %162 = vmatpush1.bf16.msra.mxu0 %v128
    %163 = vmatprep.subr.bf16.mxu0 0
    %164 = vmatpush1.bf16.msra.mxu0 %v129
    %165 = vmatprep.subr.bf16.mxu0 0
    %166 = vmatpush1.bf16.msra.mxu0 %v130
    %167 = vmatprep.subr.bf16.mxu0 0
    %168 = vmatpush1.bf16.msra.mxu0 %v131
    %169 = vmatprep.subr.bf16.mxu0 0
    %170 = vmatpush1.bf16.msra.mxu0 %v132
    %171 = vmatprep.subr.bf16.mxu0 0
    %172 = vmatpush1.bf16.msra.mxu0 %v133
    %173 = vmatprep.subr.bf16.mxu0 0
    %174 = vmatpush1.bf16.msra.mxu0 %v134
    %175 = vmatprep.subr.bf16.mxu0 0
    %176 = vmatpush1.bf16.msra.mxu0 %v135
    %177 = vmatprep.subr.bf16.mxu0 0
    %178 = vmatpush1.bf16.msra.mxu0 %v136
    %179 = vmatprep.subr.bf16.mxu0 0
    %180 = vmatpush1.bf16.msra.mxu0 %v137
    %181 = vmatprep.subr.bf16.mxu0 0
    %182 = vmatpush1.bf16.msra.mxu0 %v138
    %183 = vmatprep.subr.bf16.mxu0 0
    %184 = vmatpush1.bf16.msra.mxu0 %v139
    %185 = vmatprep.subr.bf16.mxu0 0
    %186 = vmatpush1.bf16.msra.mxu0 %v140
    %187 = vmatprep.subr.bf16.mxu0 0
    %188 = vmatpush1.bf16.msra.mxu0 %v141
    %189 = vmatprep.subr.bf16.mxu0 0
    %190 = vmatpush1.bf16.msra.mxu0 %v142
    %191 = vmatprep.mubr.bf16.mxu0 %v60
    %192 = vmatmul.mubr.bf16.gmra.mrb[0].mxu0 %v59
    %v193 = vpop.f32.mrb[0].mxu0
    %v194 = vadd.f32 %v54, %v193
    %v195 = vpop.f32.mrb[0].mxu0
    %v196 = vpop.f32.mrb[0].mxu0
    %v197 = vpop.f32.mrb[0].mxu0
    %198 = vdwg.mxu0
    %v199 = vpack.c.bf16 %v194, %v194
    %vm200 = vcmask 257024
    %201 = vst.msk [vmem:[#allocation2] sm:$0xf] %vm200, %v199
    // Predicated region
    $region14: #{_vit_patch_embed.1} parent=1 // pred_check
      _
    $region15: #{_vit_patch_embed.1} parent=1 // pred_check_branch
      %203 = sbr.rel (0) target = $region17
    $region16: #{_vit_patch_embed.1} parent=1 // pred_region
      %s205 = ssub.s32 64, 64
      %206 = vsyncadd [#allocation3], %s205
      %s208 = sshll.u32 [#allocation2], 4
      %s209 = int_to_ptr.vmem [resolvable:$true] %s208
      %211 = dma.vmem_to_hbm [thread:$0]  %s209, 64, %s3, [#allocation3]
    $region17: #{_vit_patch_embed.1} parent=1 // pred_fallthru
      _
    // Predicated region
    $region18: #{_vit_patch_embed.1} parent=1 // pred_check
      _
    $region19: #{_vit_patch_embed.1} parent=1 // pred_check_branch
      %213 = sbr.rel (0) target = $region21
    $region20: #{_vit_patch_embed.1} parent=1 // pred_region
      %214 = dma.done [#allocation3], 64
    $region21: #{_vit_patch_embed.1} parent=1 // pred_fallthru
      _
    %215 = vsyncpa [#allocation3], 1

</llo_original>
